<compile_context>
chip_gen: v5e
topology: v5e:2x2
jax: 0.10.0
libtpu: 0.0.40
codegen_flags: <defaults>
</compile_context>

<pallas_src>
import functools

import jax
import jax.numpy as jnp
from jax.experimental import pallas as pl
from jax.experimental.pallas import tpu as pltpu


def _round_up(x, m):
    return ((x + m - 1) // m) * m


def _gaussian_mlp_kernel(std_ref, x_ref, w0_ref, b0_ref, w1_ref, b1_ref,
                         wl_ref, bl_ref, noise_ref, samples_ref, means_ref):
    """Transposed fused MLP tile: [features, TB] activations, batch on lanes.

    x_ref:  [IN,  TB]  (bf16)      w*_ref: [out, in] (bf16, PyTorch layout)
    b*_ref: [out, 1 ]  (f32)       noise:  [1,   TB] (f32)
    """
    cdt = x_ref.dtype  # MXU compute dtype (bf16)

    # hidden layer 0: W0 @ X -> [H0, TB], f32 accumulate; f32 bias+relu epilogue.
    h = jnp.dot(w0_ref[...], x_ref[...], preferred_element_type=jnp.float32)
    h = jnp.maximum(h + b0_ref[...], 0.0)

    # hidden layer 1.
    h = jnp.dot(w1_ref[...], h.astype(cdt), preferred_element_type=jnp.float32)
    h = jnp.maximum(h + b1_ref[...], 0.0)

    # last fc (identity output activation) -> means.
    means = jnp.dot(wl_ref[...], h.astype(cdt), preferred_element_type=jnp.float32)
    means = means + bl_ref[...]
    means_ref[...] = means

    # Gaussian sample: mean + exp(log_std) * eps   (std precomputed, lives in SMEM).
    samples_ref[...] = means + std_ref[0] * noise_ref[...]


@functools.partial(jax.jit, static_argnames=("block_b",))
def gaussian_mlp_forward(x, w0, b0, w1, b1, wl, bl, log_std, noise, *, block_b=1024):
    """Returns (samples, means), each [batch, output_size]."""
    B, in_size = x.shape
    h0, h1, out_size = w0.shape[0], w1.shape[0], wl.shape[0]
    compute_dtype = jnp.bfloat16

    # Batch tile: big enough to amortize the ~0.35us/step overhead, lane-aligned (128),
    # re-derived small when the call-site batch is tiny.
    tb = block_b if B >= block_b else _round_up(B, 128)
    b_pad = _round_up(B, tb)
    grid = (b_pad // tb,)

    # Wrapper-side layout plumbing: transpose to [features, batch], pad batch, cast.
    x_t = jnp.pad(x, ((0, b_pad - B), (0, 0))).T.astype(compute_dtype)        # [IN, B_pad]
    noise_t = jnp.pad(noise, ((0, b_pad - B), (0, 0))).T.astype(jnp.float32)  # [1,  B_pad]
    std = jnp.exp(log_std).reshape((1,)).astype(jnp.float32)                  # SMEM scalar

    w0c = w0.astype(compute_dtype)
    w1c = w1.astype(compute_dtype)
    wlc = wl.astype(compute_dtype)
    b0c = b0.reshape(h0, 1).astype(jnp.float32)
    b1c = b1.reshape(h1, 1).astype(jnp.float32)
    blc = bl.reshape(out_size, 1).astype(jnp.float32)

    cost = pl.CostEstimate(
        flops=2 * b_pad * (in_size * h0 + h0 * h1 + h1 * out_size),
        transcendentals=0,
        bytes_accessed=(x_t.size * 2 + noise_t.size * 4
                        + (w0c.size + w1c.size + wlc.size) * 2
                        + (b0c.size + b1c.size + blc.size) * 4
                        + 2 * b_pad * out_size * 4),
    )

    # Weights/biases: full-array blocks with constant index_map -> resident in VMEM.
    def resident(a):
        return pl.BlockSpec(a.shape, lambda i: (0,) * a.ndim)

    samples_t, means_t = pl.pallas_call(
        _gaussian_mlp_kernel,
        out_shape=(jax.ShapeDtypeStruct((out_size, b_pad), jnp.float32),
                   jax.ShapeDtypeStruct((out_size, b_pad), jnp.float32)),
        grid=grid,
        in_specs=[
            pl.BlockSpec(memory_space=pltpu.MemorySpace.SMEM),      # std (scalar)
            pl.BlockSpec((in_size, tb), lambda i: (0, i)),          # x_t (pipelined)
            resident(w0c), resident(b0c),
            resident(w1c), resident(b1c),
            resident(wlc), resident(blc),
            pl.BlockSpec((out_size, tb), lambda i: (0, i)),         # noise (pipelined)
        ],
        out_specs=(pl.BlockSpec((out_size, tb), lambda i: (0, i)),  # samples
                   pl.BlockSpec((out_size, tb), lambda i: (0, i))), # means
        compiler_params=pltpu.CompilerParams(
            dimension_semantics=("parallel",)),                     # 2 TCs on v7x
        cost_estimate=cost,
    )(std, x_t, w0c, b0c, w1c, b1c, wlc, blc, noise_t)

    samples = samples_t[:, :B].T
    means = means_t[:, :B].T
    return samples, means


def init_params(key, input_size, hidden_sizes, output_size,
                init_w=0.003, b_init_value=0.1):
    """Mirrors the PyTorch module's __init__ (weights kept in PyTorch [out, in] layout).

    - hidden weights: fanin_init -> uniform(-1/sqrt(fan_in), 1/sqrt(fan_in))
    - hidden biases:  filled with b_init_value
    - last fc weight/bias: uniform(-init_w, init_w)
    """
    params = []
    in_size = input_size
    for next_size in hidden_sizes:
        key, kw = jax.random.split(key)
        bound = in_size ** -0.5
        w = jax.random.uniform(kw, (next_size, in_size), jnp.float32,
                               minval=-bound, maxval=bound)
        b = jnp.full((next_size,), b_init_value, dtype=jnp.float32)
        params.append((w, b))
        in_size = next_size
    key, kw, kb = jax.random.split(key, 3)
    wl = jax.random.uniform(kw, (output_size, in_size), jnp.float32,
                            minval=-init_w, maxval=init_w)
    bl = jax.random.uniform(kb, (output_size,), jnp.float32,
                            minval=-init_w, maxval=init_w)
    params.append((wl, bl))
    return params


def reference_forward(x, w0, b0, w1, b1, wl, bl, log_std, noise,
                      compute_dtype=jnp.bfloat16):
    """Pure-JAX reference with the same bf16-in / f32-accumulate numerics."""
    h = x.astype(compute_dtype)
    for w, b in ((w0, b0), (w1, b1)):
        pre = jnp.dot(h, w.T.astype(compute_dtype),
                      preferred_element_type=jnp.float32) + b[None, :]
        h = jnp.maximum(pre, 0.0).astype(compute_dtype)
    means = jnp.dot(h, wl.T.astype(compute_dtype),
                    preferred_element_type=jnp.float32) + bl[None, :]
    samples = means + jnp.exp(log_std) * noise
    return samples, means


if __name__ == "__main__":
    # GaussianMlpBaseline: output_size is fixed to 1; small RL-style shapes.
    batch, input_size, hidden_sizes, output_size = 2, 16, (32, 32), 1
    init_std = 1.0

    key = jax.random.PRNGKey(0)
    key, kx, kn = jax.random.split(key, 3)
    x = jax.random.normal(kx, (batch, input_size), dtype=jnp.float32)
    # eps for dist.sample(); the kernel computes means + exp(log_std) * eps.
    noise = jax.random.normal(kn, (batch, output_size), dtype=jnp.float32)
    log_std = jnp.log(jnp.asarray(init_std, dtype=jnp.float32))

    params = init_params(key, input_size, hidden_sizes, output_size)
    (w0, b0), (w1, b1), (wl, bl) = params

    samples, means = gaussian_mlp_forward(x, w0, b0, w1, b1, wl, bl, log_std, noise)
    samples, means = jax.block_until_ready((samples, means))

    ref_s, ref_m = reference_forward(x, w0, b0, w1, b1, wl, bl, log_std, noise)
    info = dict(mean=means, log_std=log_std)  # mirrors the module's info dict
    # TODO(synk): torch.distributions.Normal object (info['dist']) has no Pallas
    # equivalent; sampling is done as mean + exp(log_std)*eps. layer_norm=True branch
    # of Mlp (module default False) is not exercised.

    assert samples.shape == (batch, output_size)
    assert means.shape == (batch, output_size)
    assert jnp.allclose(means, ref_m, atol=1e-4, rtol=1e-2)
    assert jnp.allclose(samples, ref_s, atol=1e-4, rtol=1e-2)
    print("KERNEL_OK")
</pallas_src>

<mosaic_0001>
module attributes {stable_mosaic.version = 11 : i64} {
  func.func @_gaussian_mlp_kernel(%arg0: i32, %arg1: memref<1xf32, #tpu.memory_space<smem>>, %arg2: memref<16x128xbf16, #tpu.memory_space<vmem>>, %arg3: memref<32x16xbf16, #tpu.memory_space<vmem>>, %arg4: memref<32x1xf32, #tpu.memory_space<vmem>>, %arg5: memref<32x32xbf16, #tpu.memory_space<vmem>>, %arg6: memref<32x1xf32, #tpu.memory_space<vmem>>, %arg7: memref<1x32xbf16, #tpu.memory_space<vmem>>, %arg8: memref<1x1xf32, #tpu.memory_space<vmem>>, %arg9: memref<1x128xf32, #tpu.memory_space<vmem>>, %arg10: memref<1x128xf32, #tpu.memory_space<vmem>>, %arg11: memref<1x128xf32, #tpu.memory_space<vmem>>) attributes {dimension_semantics = [#tpu.dimension_semantics<parallel>], iteration_bounds = array<i64: 1>, scalar_prefetch = 0 : i64, scratch_operands = 0 : i64, tpu.core_type = #tpu.core_type<tc>, window_params = [{transform_indices = @transform_0, window_bounds = array<i64: 1>}, {transform_indices = @transform_1, window_bounds = array<i64: 16, 128>}, {pipeline_mode = #tpu.pipeline_mode<synchronous>, transform_indices = @transform_2, window_bounds = array<i64: 32, 16>}, {pipeline_mode = #tpu.pipeline_mode<synchronous>, transform_indices = @transform_3, window_bounds = array<i64: 32, 1>}, {pipeline_mode = #tpu.pipeline_mode<synchronous>, transform_indices = @transform_4, window_bounds = array<i64: 32, 32>}, {pipeline_mode = #tpu.pipeline_mode<synchronous>, transform_indices = @transform_5, window_bounds = array<i64: 32, 1>}, {pipeline_mode = #tpu.pipeline_mode<synchronous>, transform_indices = @transform_6, window_bounds = array<i64: 1, 32>}, {pipeline_mode = #tpu.pipeline_mode<synchronous>, transform_indices = @transform_7, window_bounds = array<i64: 1, 1>}, {transform_indices = @transform_8, window_bounds = array<i64: 1, 128>}, {transform_indices = @transform_9, window_bounds = array<i64: 1, 128>}, {transform_indices = @transform_10, window_bounds = array<i64: 1, 128>}]} {
    %c0 = arith.constant 0 : index
    %c0_0 = arith.constant 0 : index
    %0 = vector.load %arg3[%c0, %c0_0] : memref<32x16xbf16, #tpu.memory_space<vmem>>, vector<32x16xbf16>
    %c0_1 = arith.constant 0 : index
    %c0_2 = arith.constant 0 : index
    %1 = vector.load %arg2[%c0_1, %c0_2] : memref<16x128xbf16, #tpu.memory_space<vmem>>, vector<16x128xbf16>
    %cst = arith.constant dense<0.000000e+00> : vector<32x128xf32>
    %2 = tpu.matmul %0, %1, %cst {dimension_numbers = #tpu.dot_dimension_numbers<[1], [0], [0], [1], [0, 0, 1, 1], [], []>} : vector<32x16xbf16>, vector<16x128xbf16>, vector<32x128xf32> -> vector<32x128xf32>
    %c0_3 = arith.constant 0 : index
    %c0_4 = arith.constant 0 : index
    %3 = vector.load %arg4[%c0_3, %c0_4] : memref<32x1xf32, #tpu.memory_space<vmem>>, vector<32x1xf32>
    %4 = vector.broadcast %3 : vector<32x1xf32> to vector<32x128xf32>
    %5 = arith.addf %2, %4 : vector<32x128xf32>
    %cst_5 = arith.constant 0.000000e+00 : f32
    %6 = vector.broadcast %cst_5 : f32 to vector<32x128xf32>
    %7 = arith.maximumf %5, %6 : vector<32x128xf32>
    %c0_6 = arith.constant 0 : index
    %c0_7 = arith.constant 0 : index
    %8 = vector.load %arg5[%c0_6, %c0_7] : memref<32x32xbf16, #tpu.memory_space<vmem>>, vector<32x32xbf16>
    %9 = arith.truncf %7 : vector<32x128xf32> to vector<32x128xbf16>
    %cst_8 = arith.constant dense<0.000000e+00> : vector<32x128xf32>
    %10 = tpu.matmul %8, %9, %cst_8 {dimension_numbers = #tpu.dot_dimension_numbers<[1], [0], [0], [1], [0, 0, 1, 1], [], []>} : vector<32x32xbf16>, vector<32x128xbf16>, vector<32x128xf32> -> vector<32x128xf32>
    %c0_9 = arith.constant 0 : index
    %c0_10 = arith.constant 0 : index
    %11 = vector.load %arg6[%c0_9, %c0_10] : memref<32x1xf32, #tpu.memory_space<vmem>>, vector<32x1xf32>
    %12 = vector.broadcast %11 : vector<32x1xf32> to vector<32x128xf32>
    %13 = arith.addf %10, %12 : vector<32x128xf32>
    %cst_11 = arith.constant 0.000000e+00 : f32
    %14 = vector.broadcast %cst_11 : f32 to vector<32x128xf32>
    %15 = arith.maximumf %13, %14 : vector<32x128xf32>
    %c0_12 = arith.constant 0 : index
    %c0_13 = arith.constant 0 : index
    %16 = vector.load %arg7[%c0_12, %c0_13] : memref<1x32xbf16, #tpu.memory_space<vmem>>, vector<1x32xbf16>
    %17 = arith.truncf %15 : vector<32x128xf32> to vector<32x128xbf16>
    %cst_14 = arith.constant dense<0.000000e+00> : vector<1x128xf32>
    %18 = tpu.matmul %16, %17, %cst_14 {dimension_numbers = #tpu.dot_dimension_numbers<[1], [0], [0], [1], [0, 0, 1, 1], [], []>} : vector<1x32xbf16>, vector<32x128xbf16>, vector<1x128xf32> -> vector<1x128xf32>
    %c0_15 = arith.constant 0 : index
    %c0_16 = arith.constant 0 : index
    %19 = vector.load %arg8[%c0_15, %c0_16] : memref<1x1xf32, #tpu.memory_space<vmem>>, vector<1x1xf32>
    %20 = vector.broadcast %19 : vector<1x1xf32> to vector<1x128xf32>
    %21 = arith.addf %18, %20 : vector<1x128xf32>
    %c0_17 = arith.constant 0 : index
    %c0_18 = arith.constant 0 : index
    %22 = vector.load %arg11[%c0_17, %c0_18] : memref<1x128xf32, #tpu.memory_space<vmem>>, vector<1x128xf32>
    tpu.vector_store %arg11[%c0_17, %c0_18], %21 {strides = array<i32>} : memref<1x128xf32, #tpu.memory_space<vmem>>, vector<1x128xf32>,
    %c0_19 = arith.constant 0 : index
    %23 = memref.load %arg1[%c0_19] : memref<1xf32, #tpu.memory_space<smem>>
    %c0_20 = arith.constant 0 : index
    %c0_21 = arith.constant 0 : index
    %24 = vector.load %arg9[%c0_20, %c0_21] : memref<1x128xf32, #tpu.memory_space<vmem>>, vector<1x128xf32>
    %25 = vector.broadcast %23 : f32 to vector<1x128xf32>
    %26 = arith.mulf %25, %24 : vector<1x128xf32>
    %27 = arith.addf %21, %26 : vector<1x128xf32>
    %c0_22 = arith.constant 0 : index
    %c0_23 = arith.constant 0 : index
    %28 = vector.load %arg10[%c0_22, %c0_23] : memref<1x128xf32, #tpu.memory_space<vmem>>, vector<1x128xf32>
    tpu.vector_store %arg10[%c0_22, %c0_23], %27 {strides = array<i32>} : memref<1x128xf32, #tpu.memory_space<vmem>>, vector<1x128xf32>,
    return
  }
  func.func @transform_0(%arg0: i32) -> i32 {
    %c0_i32 = arith.constant 0 : i32
    %c0_i32_0 = arith.constant 0 : i32
    return %c0_i32 : i32
  }
  func.func @transform_1(%arg0: i32) -> (i32, i32) {
    %c0_i32 = arith.constant 0 : i32
    %c0_i32_0 = arith.constant 0 : i32
    return %c0_i32, %arg0 : i32, i32
  }
  func.func @transform_2(%arg0: i32) -> (i32, i32) {
    %c0_i32 = arith.constant 0 : i32
    %c0_i32_0 = arith.constant 0 : i32
    %c0_i32_1 = arith.constant 0 : i32
    return %c0_i32, %c0_i32_0 : i32, i32
  }
  func.func @transform_3(%arg0: i32) -> (i32, i32) {
    %c0_i32 = arith.constant 0 : i32
    %c0_i32_0 = arith.constant 0 : i32
    %c0_i32_1 = arith.constant 0 : i32
    return %c0_i32, %c0_i32_0 : i32, i32
  }
  func.func @transform_4(%arg0: i32) -> (i32, i32) {
    %c0_i32 = arith.constant 0 : i32
    %c0_i32_0 = arith.constant 0 : i32
    %c0_i32_1 = arith.constant 0 : i32
    return %c0_i32, %c0_i32_0 : i32, i32
  }
  func.func @transform_5(%arg0: i32) -> (i32, i32) {
    %c0_i32 = arith.constant 0 : i32
    %c0_i32_0 = arith.constant 0 : i32
    %c0_i32_1 = arith.constant 0 : i32
    return %c0_i32, %c0_i32_0 : i32, i32
  }
  func.func @transform_6(%arg0: i32) -> (i32, i32) {
    %c0_i32 = arith.constant 0 : i32
    %c0_i32_0 = arith.constant 0 : i32
    %c0_i32_1 = arith.constant 0 : i32
    return %c0_i32, %c0_i32_0 : i32, i32
  }
  func.func @transform_7(%arg0: i32) -> (i32, i32) {
    %c0_i32 = arith.constant 0 : i32
    %c0_i32_0 = arith.constant 0 : i32
    %c0_i32_1 = arith.constant 0 : i32
    return %c0_i32, %c0_i32_0 : i32, i32
  }
  func.func @transform_8(%arg0: i32) -> (i32, i32) {
    %c0_i32 = arith.constant 0 : i32
    %c0_i32_0 = arith.constant 0 : i32
    return %c0_i32, %arg0 : i32, i32
  }
  func.func @transform_9(%arg0: i32) -> (i32, i32) {
    %c0_i32 = arith.constant 0 : i32
    %c0_i32_0 = arith.constant 0 : i32
    return %c0_i32, %arg0 : i32, i32
  }
  func.func @transform_10(%arg0: i32) -> (i32, i32) {
    %c0_i32 = arith.constant 0 : i32
    %c0_i32_0 = arith.constant 0 : i32
    return %c0_i32, %arg0 : i32, i32
  }
}

</mosaic_0001>

<llo_original>
// kernel: gaussian_mlp_forward.1
$region0: #{gaussian_mlp_forward.1}
  #allocation0 [shape = 'u32[]', space=smem, size = 0x4, offset = 0x4, fixed_abs, tag = 'smem constant byte address 0x4 - core index']
  #allocation1 [shape = 'u32[72,128]{1,0:T(1,128)}', space=vmem, size = 0x9000, scoped, tag = 'internal scratch']
  #allocation2 [shape = 'f32[1]{0:T(128)S(6)}', space=smem, size = 0x200, scoped, tag = 'scoped memory for gaussian_mlp_forward.1']
  #allocation3 [shape = 'f32[1,1]{1,0:T(1,128)S(1)}', space=vmem, size = 0x200, scoped, tag = 'scoped memory for gaussian_mlp_forward.1']
  %s0 = inlined_call_operand.<no memory space> [shape: f32[1], index: 0, kind: input, shape index: {}]
  %s1 = inlined_call_operand.vmem [shape: bf16[16,128], index: 1, kind: input, shape index: {}]
  %s2 = inlined_call_operand.vmem [shape: bf16[32,16], index: 2, kind: input, shape index: {}]
  %s3 = inlined_call_operand.vmem [shape: f32[32,1], index: 3, kind: input, shape index: {}]
  %s4 = inlined_call_operand.vmem [shape: bf16[32,32], index: 4, kind: input, shape index: {}]
  %s5 = inlined_call_operand.vmem [shape: f32[32,1], index: 5, kind: input, shape index: {}]
  %s6 = inlined_call_operand.vmem [shape: bf16[1,32], index: 6, kind: input, shape index: {}]
  %s7 = inlined_call_operand.<no memory space> [shape: f32[1,1], index: 7, kind: input, shape index: {}]
  %s8 = inlined_call_operand.vmem [shape: f32[1,128], index: 8, kind: input, shape index: {}]
  %s9 = inlined_call_operand.vmem [shape: f32[1,128], index: 9, kind: output, shape index: {0}]
  %s10 = inlined_call_operand.vmem [shape: f32[1,128], index: 10, kind: output, shape index: {1}]
  %11 = xla_tuple %s9, %s10
  %s12 = sld [smem:[#allocation0]]
  $region54: #{gaussian_mlp_forward.1} parent=0
    _
  %s14 = ssub.s32 1, %s12
  %s15 = scalar_select 0, %s14, %s12
  %16 = sst [smem:[#allocation2]] %s0
  %v17 = vstv %s7
  %18 = vst [vmem:[#allocation3] sm:$0x1] %v17
  // Predicated region
  $region2: #{gaussian_mlp_forward.1} parent=0 // pred_check
    _
  $region3: #{gaussian_mlp_forward.1} parent=0 // pred_check_branch
    %20 = sbr.rel (0) target = $region5
  $region4: #{gaussian_mlp_forward.1} parent=0 // pred_region
    _
  $region5: #{gaussian_mlp_forward.1} parent=0 // pred_fallthru
    _
  // Predicated region
  $region6: #{gaussian_mlp_forward.1} parent=0 // pred_check
    _
  $region7: #{gaussian_mlp_forward.1} parent=0 // pred_check_branch
    %22 = sbr.rel (0) target = $region9
  $region8: #{gaussian_mlp_forward.1} parent=0 // pred_region
    _
  $region9: #{gaussian_mlp_forward.1} parent=0 // pred_fallthru
    _
  // Predicated region
  $region10: #{gaussian_mlp_forward.1} parent=0 // pred_check
    _
  $region11: #{gaussian_mlp_forward.1} parent=0 // pred_check_branch
    %24 = sbr.rel (0) target = $region13
  $region12: #{gaussian_mlp_forward.1} parent=0 // pred_region
    _
  $region13: #{gaussian_mlp_forward.1} parent=0 // pred_fallthru
    _
  // Predicated region
  $region14: #{gaussian_mlp_forward.1} parent=0 // pred_check
    _
  $region15: #{gaussian_mlp_forward.1} parent=0 // pred_check_branch
    %26 = sbr.rel (0) target = $region17
  $region16: #{gaussian_mlp_forward.1} parent=0 // pred_region
    _
  $region17: #{gaussian_mlp_forward.1} parent=0 // pred_fallthru
    _
  // Predicated region
  $region18: #{gaussian_mlp_forward.1} parent=0 // pred_check
    _
  $region19: #{gaussian_mlp_forward.1} parent=0 // pred_check_branch
    %28 = sbr.rel (0) target = $region21
  $region20: #{gaussian_mlp_forward.1} parent=0 // pred_region
    _
  $region21: #{gaussian_mlp_forward.1} parent=0 // pred_fallthru
    _
  // Predicated region
  $region22: #{gaussian_mlp_forward.1} parent=0 // pred_check
    _
  $region23: #{gaussian_mlp_forward.1} parent=0 // pred_check_branch
    %30 = sbr.rel (0) target = $region25
  $region24: #{gaussian_mlp_forward.1} parent=0 // pred_region
    _
  $region25: #{gaussian_mlp_forward.1} parent=0 // pred_fallthru
    _
  // Predicated region
  $region26: #{gaussian_mlp_forward.1} parent=0 // pred_check
    _
  $region27: #{gaussian_mlp_forward.1} parent=0 // pred_check_branch
    %32 = sbr.rel (0) target = $region29
  $region28: #{gaussian_mlp_forward.1} parent=0 // pred_region
    _
  $region29: #{gaussian_mlp_forward.1} parent=0 // pred_fallthru
    _
  // Predicated region
  $region30: #{gaussian_mlp_forward.1} parent=0 // pred_check
    _
  $region31: #{gaussian_mlp_forward.1} parent=0 // pred_check_branch
    %34 = sbr.rel (0) target = $region33
  $region32: #{gaussian_mlp_forward.1} parent=0 // pred_region
    _
  $region33: #{gaussian_mlp_forward.1} parent=0 // pred_fallthru
    _
  // Predicated region
  $region34: #{gaussian_mlp_forward.1} parent=0 // pred_check
    _
  $region35: #{gaussian_mlp_forward.1} parent=0 // pred_check_branch
    %36 = sbr.rel (0) target = $region37
  $region36: #{gaussian_mlp_forward.1} parent=0 // pred_region
    _
  $region37: #{gaussian_mlp_forward.1} parent=0 // pred_fallthru
    _
  %v38 = vld [vmem:[%s2] sm:$0xf]
  %v39 = vld [vmem:[%s2 + $0x4] sm:$0xf]
  %v40 = vld [vmem:[%s2 + $0x8] sm:$0xf]
  %v41 = vld [vmem:[%s2 + $0xc] sm:$0xf]
  %v42 = vld [vmem:[%s1] sm:$0xf]
  %v43 = vld [vmem:[%s1 + $0x4] sm:$0xf]
  %v44 = vld [vmem:[%s3] sm:$0xff]
  %v45 = vld [vmem:[%s3 + $0x8] sm:$0xff]
  %v46 = vld [vmem:[%s3 + $0x10] sm:$0xff]
  %v47 = vld [vmem:[%s3 + $0x18] sm:$0xff]
  %49 = vset.pattern.permute.xlu0 0
  %50 = vperm.xlu0 %49, %v44
  %v51 = vpop.permute.xlu0 %50
  %54 = vset.pattern.permute.xlu0 0
  %55 = vperm.xlu0 %54, %v45
  %v56 = vpop.permute.xlu0 %55
  %59 = vset.pattern.permute.xlu0 0
  %60 = vperm.xlu0 %59, %v46
  %v61 = vpop.permute.xlu0 %60
  %64 = vset.pattern.permute.xlu0 0
  %65 = vperm.xlu0 %64, %v47
  %v66 = vpop.permute.xlu0 %65
  %v72 = vunpack.c.l.b16 %v38
  %v73 = vunpack.c.l.b16 %v39
  %v74 = vunpack.c.l.b16 %v40
  %v75 = vunpack.c.l.b16 %v41
  %v76 = vpack.c.b16 %v73, %v72
  %v77 = vpack.c.b16 %v75, %v74
  %v80 = vunpack.c.l.b16 %v42
  %v81 = vunpack.c.l.b16 %v43
  %v82 = vpack.c.b16 %v81, %v80
  %vm84 = vcmask 130048
  %v86 = vsel %vm84, %v76, 0
  %v89 = vsel %vm84, %v77, 0
  %91 = vmatpush.bf16.msra.mxu0 0
  %92 = vmatpush.bf16.msra.mxu0 0
  %93 = vmatpush.bf16.msra.mxu0 0
  %94 = vmatpush.bf16.msra.mxu0 0
  %95 = vmatpush.bf16.msra.mxu0 0
  %96 = vmatpush.bf16.msra.mxu0 0
  %97 = vmatpush.bf16.msra.mxu0 0
  %98 = vmatpush.bf16.msra.mxu0 %v82
  %99 = vmatmul.bf16.gmra.mxu0 %v86
  %v100 = vpop.f32.mrf.mxu0
  %v101 = vadd.f32 %v51, %v100
  %v102 = vpop.f32.mrf.mxu0
  %v103 = vadd.f32 %v56, %v102
  %104 = vmatmul.bf16.gmra.mxu0 %v89
  %v105 = vpop.f32.mrf.mxu0
  %v106 = vadd.f32 %v61, %v105
  %v107 = vpop.f32.mrf.mxu0
  %v108 = vadd.f32 %v66, %v107
  %109 = vdwg.mxu0
  %v110 = vmax.f32 %v101, 0.0
  %v111 = vmax.f32 %v103, 0.0
  %v112 = vmax.f32 %v106, 0.0
  %v113 = vmax.f32 %v108, 0.0
  %v114 = vld [vmem:[%s4] sm:$0xf]
  %v115 = vld [vmem:[%s4 + $0x4] sm:$0xf]
  %v116 = vld [vmem:[%s4 + $0x8] sm:$0xf]
  %v117 = vld [vmem:[%s4 + $0xc] sm:$0xf]
  %v118 = vpack.c.bf16 %v111, %v110
  %v119 = vpack.c.bf16 %v113, %v112
  %v120 = vld [vmem:[%s5] sm:$0xff]
  %v121 = vld [vmem:[%s5 + $0x8] sm:$0xff]
  %v122 = vld [vmem:[%s5 + $0x10] sm:$0xff]
  %v123 = vld [vmem:[%s5 + $0x18] sm:$0xff]
  %125 = vset.pattern.permute.xlu0 0
  %126 = vperm.xlu0 %125, %v120
  %v127 = vpop.permute.xlu0 %126
  %130 = vset.pattern.permute.xlu0 0
  %131 = vperm.xlu0 %130, %v121
  %v132 = vpop.permute.xlu0 %131
  %135 = vset.pattern.permute.xlu0 0
  %136 = vperm.xlu0 %135, %v122
  %v137 = vpop.permute.xlu0 %136
  %140 = vset.pattern.permute.xlu0 0
  %141 = vperm.xlu0 %140, %v123
  %v142 = vpop.permute.xlu0 %141
  %v148 = vunpack.c.l.b16 %v114
  %v149 = vunpack.c.l.b16 %v115
  %v150 = vunpack.c.l.b16 %v116
  %v151 = vunpack.c.l.b16 %v117
  %v152 = vpack.c.b16 %v149, %v148
  %v153 = vpack.c.b16 %v151, %v150
  %vm154 = vcmask 261120
  %v156 = vsel %vm154, %v152, 0
  %v159 = vsel %vm154, %v153, 0
  %161 = vmatpush.bf16.msra.mxu0 0
  %162 = vmatpush.bf16.msra.mxu0 0
  %163 = vmatpush.bf16.msra.mxu0 0
  %164 = vmatpush.bf16.msra.mxu0 0
  %165 = vmatpush.bf16.msra.mxu0 0
  %166 = vmatpush.bf16.msra.mxu0 0
  %167 = vmatpush.bf16.msra.mxu0 %v119
  %168 = vmatpush.bf16.msra.mxu0 %v118
  %169 = vmatmul.bf16.gmra.mxu0 %v156
  %v170 = vpop.f32.mrf.mxu0
  %v171 = vadd.f32 %v127, %v170
  %v172 = vpop.f32.mrf.mxu0
  %v173 = vadd.f32 %v132, %v172
  %174 = vmatmul.bf16.gmra.mxu0 %v159
  %v175 = vpop.f32.mrf.mxu0
  %v176 = vadd.f32 %v137, %v175
  %v177 = vpop.f32.mrf.mxu0
  %v178 = vadd.f32 %v142, %v177
  %179 = vdwg.mxu0
  %v180 = vmax.f32 %v171, 0.0
  %v181 = vmax.f32 %v173, 0.0
  %v182 = vmax.f32 %v176, 0.0
  %v183 = vmax.f32 %v178, 0.0
  %v184 = vld [vmem:[%s6] sm:$0x1]
  %v185 = vpack.c.bf16 %v181, %v180
  %v186 = vpack.c.bf16 %v183, %v182
  %v187 = vld [vmem:[#allocation3] sm:$0x1]
  %189 = vset.pattern.permute.xlu0 0
  %190 = vperm.xlu0 %189, %v187
  %v191 = vpop.permute.xlu0 %190
  %v193 = vperm.slane %v191, 0
  %v195 = vsel %vm154, %v184, 0
  %197 = vmatpush.bf16.msra.mxu0 0
  %198 = vmatpush.bf16.msra.mxu0 0
  %199 = vmatpush.bf16.msra.mxu0 0
  %200 = vmatpush.bf16.msra.mxu0 0
  %201 = vmatpush.bf16.msra.mxu0 0
  %202 = vmatpush.bf16.msra.mxu0 0
  %203 = vmatpush.bf16.msra.mxu0 %v186
  %204 = vmatpush.bf16.msra.mxu0 %v185
  %205 = vmatmul.bf16.gmra.mxu0 %v195
  %v206 = vpop.f32.mrf.mxu0
  %v207 = vadd.f32 %v193, %v206
  %v208 = vpop.f32.mrf.mxu0
  %209 = vdwg.mxu0
  %210 = vst [vmem:[%s10] sm:$0x1] %v207
  %s211 = sld [smem:[#allocation2]]
  %v212 = vld [vmem:[%s8] sm:$0x1]
  %v213 = vstv %s211
  %v214 = vmul.f32 %v213, %v212
  %v215 = vadd.f32 %v207, %v214
  %216 = vst [vmem:[%s9] sm:$0x1] %v215
  // Predicated region
  $region38: #{gaussian_mlp_forward.1} parent=0 // pred_check
    _
  $region39: #{gaussian_mlp_forward.1} parent=0 // pred_check_branch
    %218 = sbr.rel (0) target = $region41
  $region40: #{gaussian_mlp_forward.1} parent=0 // pred_region
    _
  $region41: #{gaussian_mlp_forward.1} parent=0 // pred_fallthru
    _
  // Predicated region
  $region42: #{gaussian_mlp_forward.1} parent=0 // pred_check
    _
  $region43: #{gaussian_mlp_forward.1} parent=0 // pred_check_branch
    %220 = sbr.rel (0) target = $region45
  $region44: #{gaussian_mlp_forward.1} parent=0 // pred_region
    _
  $region45: #{gaussian_mlp_forward.1} parent=0 // pred_fallthru
    _
  // Predicated region
  $region46: #{gaussian_mlp_forward.1} parent=0 // pred_check
    _
  $region47: #{gaussian_mlp_forward.1} parent=0 // pred_check_branch
    %222 = sbr.rel (0) target = $region49
  $region48: #{gaussian_mlp_forward.1} parent=0 // pred_region
    _
  $region49: #{gaussian_mlp_forward.1} parent=0 // pred_fallthru
    _
  // Predicated region
  $region50: #{gaussian_mlp_forward.1} parent=0 // pred_check
    _
  $region51: #{gaussian_mlp_forward.1} parent=0 // pred_check_branch
    %224 = sbr.rel (0) target = $region53
  $region52: #{gaussian_mlp_forward.1} parent=0 // pred_region
    _
  $region53: #{gaussian_mlp_forward.1} parent=0 // pred_fallthru
    _

</llo_original>
